<compile_context>
chip_gen: v5e
topology: v5e:2x2
jax: 0.10.0
libtpu: 0.0.40
codegen_flags: <defaults>
</compile_context>

<pallas_src>
import jax
import jax.numpy as jnp
from jax.experimental import pallas as pl
from jax.experimental.pallas import tpu as pltpu

VISUAL_DIM = 768     # hardcoded in MAIL(cfg, visual_dim=768, ...)
TEXT_DIM = 512       # hardcoded in MAIL(cfg, ..., text_dim=512)
MAX_ROW_TILE = 512   # rows per grid step (sublane-aligned, mem-bound sweet spot,
                     # fits comfortably in scoped VMEM on v5e/v6e/v7x)


class Cfg:
    d = 8                  # low-rank dim of text->visual projection
    t = 1.0                # scale on text_proj_down init
    start_layer = 0
    end_layer = 3
    ivlu_end_layer = 2     # number of MAIL clones per list
    maple_depth = 1
    alpha = 0.0
    textNumTokens = 4
    ctx_init = None
    image_size = 224


# ---------------------------------------------------------------------------
# Pallas kernel: out = x * a + b  (a, b broadcast over rows)
# ---------------------------------------------------------------------------
def _affine_kernel(x_ref, a_ref, b_ref, o_ref):
    o_ref[...] = (x_ref[...] * a_ref[...] + b_ref[...]).astype(o_ref.dtype)


# ---------------------------------------------------------------------------
# Tiling helpers
# ---------------------------------------------------------------------------
def _round_up(n, m):
    return ((n + m - 1) // m) * m


def _choose_row_tile(n_rows):
    # Largest sublane-aligned tile up to MAX_ROW_TILE.
    return min(MAX_ROW_TILE, _round_up(max(n_rows, 1), 8))


def _pad_rows(x, axis, tile):
    r = x.shape[axis]
    r_pad = _round_up(r, tile)
    if r_pad != r:
        pad = [(0, 0)] * x.ndim
        pad[axis] = (0, r_pad - r)
        x = jnp.pad(x, pad)
    return x, r


# ---------------------------------------------------------------------------
# Single-layer affine launch: x2d (R, D), a/b (D,)
# ---------------------------------------------------------------------------
def _run_affine(x2d, a, b):
    R, D = x2d.shape
    tile = _choose_row_tile(R)
    xp, _ = _pad_rows(x2d, 0, tile)
    Rp = xp.shape[0]
    out = pl.pallas_call(
        _affine_kernel,
        out_shape=jax.ShapeDtypeStruct((Rp, D), x2d.dtype),
        grid_spec=pltpu.PrefetchScalarGridSpec(
            num_scalar_prefetch=0,
            grid=(Rp // tile,),
            in_specs=[
                pl.BlockSpec((tile, D), lambda i: (i, 0)),
                pl.BlockSpec((1, D), lambda i: (0, 0)),
                pl.BlockSpec((1, D), lambda i: (0, 0)),
            ],
            out_specs=pl.BlockSpec((tile, D), lambda i: (i, 0)),
        ),
        compiler_params=pltpu.CompilerParams(dimension_semantics=("parallel",)),
    )(xp, a.reshape(1, D), b.reshape(1, D))
    return out[:R]


# ---------------------------------------------------------------------------
# Fused multi-layer affine launch: x3d (L, R, D), a/b (L, D) -> one pallas_call
# ---------------------------------------------------------------------------
def _run_affine_stacked(x3d, a2d, b2d):
    L, R, D = x3d.shape
    tile = _choose_row_tile(R)
    xp, _ = _pad_rows(x3d, 1, tile)
    Rp = xp.shape[1]
    out = pl.pallas_call(
        _affine_kernel,
        out_shape=jax.ShapeDtypeStruct((L, Rp, D), x3d.dtype),
        grid_spec=pltpu.PrefetchScalarGridSpec(
            num_scalar_prefetch=0,
            grid=(L, Rp // tile),
            in_specs=[
                pl.BlockSpec((None, tile, D), lambda l, i: (l, i, 0)),
                pl.BlockSpec((None, 1, D), lambda l, i: (l, 0, 0)),
                pl.BlockSpec((None, 1, D), lambda l, i: (l, 0, 0)),
            ],
            out_specs=pl.BlockSpec((None, tile, D), lambda l, i: (l, i, 0)),
        ),
        compiler_params=pltpu.CompilerParams(
            dimension_semantics=("parallel", "parallel")),
    )(xp, a2d.reshape(L, 1, D), b2d.reshape(L, 1, D))
    return out[:, :R]


# ---------------------------------------------------------------------------
# MAIL module (parameters + forward dispatch)
# ---------------------------------------------------------------------------
def init_mail_params(key, cfg, visual_dim=VISUAL_DIM, text_dim=TEXT_DIM):
    k1, k2 = jax.random.split(key)
    visual_scale = visual_dim ** (-0.5)
    text_scale = text_dim ** (-0.5)
    return {
        "visual_a": jnp.ones((visual_dim,), jnp.float32),
        "visual_b": jnp.zeros((visual_dim,), jnp.float32),
        "text_a": jnp.ones((text_dim,), jnp.float32),
        "text_b": jnp.zeros((text_dim,), jnp.float32),
        "text_proj_down": text_scale * cfg.t
        * jax.random.normal(k1, (text_dim, cfg.d), jnp.float32),
        # initialized with scale 0 (exactly as in PyTorch: visual_scale * 0 * randn)
        "text_proj_up": visual_scale * 0.0
        * jax.random.normal(k2, (cfg.d, visual_dim), jnp.float32),
    }


def _resolve_affine(params, is_text, i, cfg):
    """Grid-invariant (a, b) for one MAIL layer; the tiny low-rank projection is
    hoisted here (once per call) instead of being recomputed every grid step."""
    if is_text:
        return params["text_a"], params["text_b"]
    if cfg.start_layer <= i <= cfg.end_layer:
        a = params["visual_a"] + (
            params["text_a"] @ params["text_proj_down"] @ params["text_proj_up"])
    else:
        a = params["visual_a"]
    return a, params["visual_b"]


def mail_forward(params, x, is_text, i, cfg):
    orig_shape = x.shape
    D = orig_shape[-1]
    a, b = _resolve_affine(params, is_text, i, cfg)
    out = _run_affine(x.reshape(-1, D), a, b)
    return out.reshape(orig_shape)


def mail_forward_fused(params_list, xs, is_text, i, cfg):
    """Apply a whole list of MAIL layers to a stacked input xs of shape
    (n_layers, ..., D) in a single pallas_call."""
    n = len(params_list)
    assert xs.shape[0] == n
    D = xs.shape[-1]
    ab = [_resolve_affine(p, is_text, i, cfg) for p in params_list]
    a = jnp.stack([t[0] for t in ab])
    b = jnp.stack([t[1] for t in ab])
    out = _run_affine_stacked(xs.reshape(n, -1, D), a, b)
    return out.reshape(xs.shape)


# ---------------------------------------------------------------------------
# MultiModalPromptLearner
# ---------------------------------------------------------------------------
class MultiModalPromptLearner:
    def __init__(self, cfg, n_cls, seq_len, key):
        self.cfg = cfg
        self.n_cls = n_cls
        self.n_ctx = cfg.textNumTokens
        self.compound_prompts_depth = cfg.maple_depth
        ctx_dim = TEXT_DIM  # stands in for clip_model.ln_final.weight.shape[0]
        k_emb, k_mail = jax.random.split(key)
        # TODO(synk): real module embeds CLIP-tokenized class prompts via
        # clip_model.token_embedding; here we synthesize the buffer deterministically.
        self.embedding = jax.random.normal(k_emb, (n_cls, seq_len, ctx_dim), jnp.float32)
        # _get_clones deep-copies a single MAIL instance -> identical initial params.
        base = init_mail_params(k_mail, cfg)
        n = cfg.ivlu_end_layer
        clone = lambda: jax.tree.map(lambda p: p, base)
        self.ln_proj_layers_mlp = [clone() for _ in range(n)]
        self.ln_proj_layers_att = [clone() for _ in range(n)]
        self.att_proj_layers_att = [clone() for _ in range(n)]
        self.mlp_proj_layers_mlp = [clone() for _ in range(n)]

    def forward(self):
        # Matches PyTorch exactly: a buffer + four lists of MAIL layers (no compute here).
        return (self.embedding,
                self.ln_proj_layers_mlp,
                self.ln_proj_layers_att,
                self.att_proj_layers_att,
                self.mlp_proj_layers_mlp)


# ---------------------------------------------------------------------------
if __name__ == "__main__":
    cfg = Cfg()
    key = jax.random.PRNGKey(0)
    k_mod, k_vis, k_txt, k_stack, k_odd = jax.random.split(key, 5)

    learner = MultiModalPromptLearner(cfg, n_cls=3, seq_len=16, key=k_mod)
    prompts, ln_mlp, ln_att, att_att, mlp_mlp = learner.forward()
    jax.block_until_ready(prompts)

    # Exercise the MAIL Pallas kernels (the compute that the returned layers perform).
    x_vis = jax.random.normal(k_vis, (2, 8, VISUAL_DIM), jnp.float32)  # (B, L, Dv)
    x_txt = jax.random.normal(k_txt, (2, 8, TEXT_DIM), jnp.float32)    # (B, L, Dt)

    p = ln_mlp[0]
    y_vis = mail_forward(p, x_vis, is_text=False, i=1, cfg=cfg)       # in-range visual path
    y_vis_out = mail_forward(p, x_vis, is_text=False, i=7, cfg=cfg)   # out-of-range path
    y_txt = mail_forward(p, x_txt, is_text=True, i=0, cfg=cfg)

    # Non-multiple-of-8 row count -> exercises the pad/slice path.
    x_odd = jax.random.normal(k_odd, (1, 5, TEXT_DIM), jnp.float32)
    y_odd = mail_forward(p, x_odd, is_text=True, i=0, cfg=cfg)

    # Fused multi-layer call: all ln_proj_layers_mlp clones on a stacked slab at once.
    xs_txt = jax.random.normal(k_stack, (len(ln_mlp), 2, 8, TEXT_DIM), jnp.float32)
    y_fused = mail_forward_fused(ln_mlp, xs_txt, is_text=True, i=0, cfg=cfg)
    xs_vis = jnp.stack([x_vis] * len(ln_att))
    y_fused_vis = mail_forward_fused(ln_att, xs_vis, is_text=False, i=1, cfg=cfg)

    jax.block_until_ready((y_vis, y_vis_out, y_txt, y_odd, y_fused, y_fused_vis))

    # Reference checks (pure JAX).
    a_ref = p["visual_a"] + p["text_a"] @ p["text_proj_down"] @ p["text_proj_up"]
    ref_vis = x_vis * a_ref + p["visual_b"]
    ref_vis_out = x_vis * p["visual_a"] + p["visual_b"]
    ref_txt = x_txt * p["text_a"] + p["text_b"]
    ref_odd = x_odd * p["text_a"] + p["text_b"]
    ref_fused = jnp.stack([xs_txt[j] * ln_mlp[j]["text_a"] + ln_mlp[j]["text_b"]
                           for j in range(len(ln_mlp))])
    ref_fused_vis = jnp.stack([
        xs_vis[j] * (ln_att[j]["visual_a"]
                     + ln_att[j]["text_a"] @ ln_att[j]["text_proj_down"]
                     @ ln_att[j]["text_proj_up"]) + ln_att[j]["visual_b"]
        for j in range(len(ln_att))])

    assert jnp.allclose(y_vis, ref_vis, atol=1e-5), "visual (in-range) mismatch"
    assert jnp.allclose(y_vis_out, ref_vis_out, atol=1e-5), "visual (out-of-range) mismatch"
    assert jnp.allclose(y_txt, ref_txt, atol=1e-5), "text mismatch"
    assert jnp.allclose(y_odd, ref_odd, atol=1e-5), "text (ragged rows) mismatch"
    assert jnp.allclose(y_fused, ref_fused, atol=1e-5), "fused text mismatch"
    assert jnp.allclose(y_fused_vis, ref_fused_vis, atol=1e-5), "fused visual mismatch"
    assert prompts.shape == (3, 16, TEXT_DIM)

    print("KERNEL_OK")
</pallas_src>

<mosaic_0001>
module attributes {stable_mosaic.version = 11 : i64} {
  func.func @_affine_kernel(%arg0: i32, %arg1: memref<16x768xf32, #tpu.memory_space<vmem>>, %arg2: memref<1x768xf32, #tpu.memory_space<vmem>>, %arg3: memref<1x768xf32, #tpu.memory_space<vmem>>, %arg4: memref<16x768xf32, #tpu.memory_space<vmem>>) attributes {dimension_semantics = [#tpu.dimension_semantics<parallel>], iteration_bounds = array<i64: 1>, scalar_prefetch = 0 : i64, scratch_operands = 0 : i64, tpu.core_type = #tpu.core_type<tc>, window_params = [{transform_indices = @transform_0, window_bounds = array<i64: 16, 768>}, {pipeline_mode = #tpu.pipeline_mode<synchronous>, transform_indices = @transform_1, window_bounds = array<i64: 1, 768>}, {pipeline_mode = #tpu.pipeline_mode<synchronous>, transform_indices = @transform_2, window_bounds = array<i64: 1, 768>}, {transform_indices = @transform_3, window_bounds = array<i64: 16, 768>}]} {
    %c0 = arith.constant 0 : index
    %c0_0 = arith.constant 0 : index
    %0 = vector.load %arg1[%c0, %c0_0] : memref<16x768xf32, #tpu.memory_space<vmem>>, vector<16x768xf32>
    %c0_1 = arith.constant 0 : index
    %c0_2 = arith.constant 0 : index
    %1 = vector.load %arg2[%c0_1, %c0_2] : memref<1x768xf32, #tpu.memory_space<vmem>>, vector<1x768xf32>
    %2 = vector.broadcast %1 : vector<1x768xf32> to vector<16x768xf32>
    %3 = arith.mulf %0, %2 : vector<16x768xf32>
    %c0_3 = arith.constant 0 : index
    %c0_4 = arith.constant 0 : index
    %4 = vector.load %arg3[%c0_3, %c0_4] : memref<1x768xf32, #tpu.memory_space<vmem>>, vector<1x768xf32>
    %5 = vector.broadcast %4 : vector<1x768xf32> to vector<16x768xf32>
    %6 = arith.addf %3, %5 : vector<16x768xf32>
    %c0_5 = arith.constant 0 : index
    %c0_6 = arith.constant 0 : index
    %7 = vector.load %arg4[%c0_5, %c0_6] : memref<16x768xf32, #tpu.memory_space<vmem>>, vector<16x768xf32>
    tpu.vector_store %arg4[%c0_5, %c0_6], %6 {strides = array<i32>} : memref<16x768xf32, #tpu.memory_space<vmem>>, vector<16x768xf32>,
    return
  }
  func.func @transform_0(%arg0: i32) -> (i32, i32) {
    %c0_i32 = arith.constant 0 : i32
    %c0_i32_0 = arith.constant 0 : i32
    return %arg0, %c0_i32 : i32, i32
  }
  func.func @transform_1(%arg0: i32) -> (i32, i32) {
    %c0_i32 = arith.constant 0 : i32
    %c0_i32_0 = arith.constant 0 : i32
    %c0_i32_1 = arith.constant 0 : i32
    return %c0_i32, %c0_i32_0 : i32, i32
  }
  func.func @transform_2(%arg0: i32) -> (i32, i32) {
    %c0_i32 = arith.constant 0 : i32
    %c0_i32_0 = arith.constant 0 : i32
    %c0_i32_1 = arith.constant 0 : i32
    return %c0_i32, %c0_i32_0 : i32, i32
  }
  func.func @transform_3(%arg0: i32) -> (i32, i32) {
    %c0_i32 = arith.constant 0 : i32
    %c0_i32_0 = arith.constant 0 : i32
    return %arg0, %c0_i32 : i32, i32
  }
}

</mosaic_0001>

<llo_original>
// kernel: tpu_custom_call.1
$region0: #{tpu_custom_call.1}
  #allocation0 [shape = 'u32[]', space=smem, size = 0x4, offset = 0x4, fixed_abs, tag = 'smem constant byte address 0x4 - core index']
  #allocation1 [shape = 'u32[72,128]{1,0:T(1,128)}', space=vmem, size = 0x9000, scoped, tag = 'internal scratch']
  %s0 = inlined_call_operand.hbm [shape: f32[16,768], index: 0, kind: input, shape index: {}]
  %s1 = inlined_call_operand.hbm [shape: f32[1,768], index: 1, kind: input, shape index: {}]
  %s2 = inlined_call_operand.hbm [shape: f32[1,768], index: 2, kind: input, shape index: {}]
  %s3 = inlined_call_operand.hbm [shape: f32[16,768], index: 3, kind: output, shape index: {}]
  %s4 = sld [smem:[#allocation0]]
  $region34: #{tpu_custom_call.1} parent=0
    _
  %s6 = ssub.s32 1, %s4
  %s7 = scalar_select 0, %s6, %s4
  $region1: #{tpu_custom_call.1} parent=0
    #allocation2 [shape = 'u8[49152]{0}', space=vmem, size = 0xc000, scoped, tag = 'input window, operand 0, single buffered']
    #allocation3 [shape = 's32[1]{0}', space=sflag, size = 0x4, scoped, tag = 'scoped memory for tpu_custom_call.1']
    #allocation4 [shape = 's32[1]{0}', space=sflag, size = 0x4, scoped, tag = 'scoped memory for tpu_custom_call.1']
    #allocation5 [shape = 'u8[3072]{0}', space=vmem, size = 0xc00, scoped, tag = 'input window, operand 1, single buffered']
    #allocation6 [shape = 's32[1]{0}', space=sflag, size = 0x4, scoped, tag = 'scoped memory for tpu_custom_call.1']
    #allocation7 [shape = 'u8[3072]{0}', space=vmem, size = 0xc00, scoped, tag = 'input window, operand 2, single buffered']
    #allocation8 [shape = 'u8[49152]{0}', space=vmem, size = 0xc000, scoped, tag = 'output window, operand 0, single buffered']
    %8 = vsyncpa [#allocation3], 0
    %9 = vsyncpa [#allocation6], 0
    %10 = vsyncpa [#allocation4], 0
    // Predicated region
    $region2: #{tpu_custom_call.1} parent=1 // pred_check
      _
    $region3: #{tpu_custom_call.1} parent=1 // pred_check_branch
      %12 = sbr.rel (0) target = $region5
    $region4: #{tpu_custom_call.1} parent=1 // pred_region
      %14 = vsyncadd [#allocation3], 0
      %s15 = sshll.u32 %s0, 4
      %s16 = int_to_ptr.hbm [resolvable:$true] %s15
      %s17 = sshll.u32 [#allocation2], 4
      %s18 = int_to_ptr.vmem [resolvable:$true] %s17
      %23 = dma.hbm_to_vmem [thread:$0]  %s16, 1536, %s18, [#allocation3], 768, 768, 48
    $region5: #{tpu_custom_call.1} parent=1 // pred_fallthru
      _
    // Predicated region
    $region6: #{tpu_custom_call.1} parent=1 // pred_check
      _
    $region7: #{tpu_custom_call.1} parent=1 // pred_check_branch
      %25 = sbr.rel (0) target = $region9
    $region8: #{tpu_custom_call.1} parent=1 // pred_region
      %27 = vsyncadd [#allocation6], 0
      %s29 = sshll.u32 %s1, 4
      %s30 = int_to_ptr.hbm [resolvable:$true] %s29
      %s31 = sshll.u32 [#allocation5], 4
      %s32 = int_to_ptr.vmem [resolvable:$true] %s31
      %34 = dma.hbm_to_vmem [thread:$0]  %s30, 96, %s32, [#allocation6]
    $region9: #{tpu_custom_call.1} parent=1 // pred_fallthru
      _
    // Predicated region
    $region10: #{tpu_custom_call.1} parent=1 // pred_check
      _
    $region11: #{tpu_custom_call.1} parent=1 // pred_check_branch
      %36 = sbr.rel (0) target = $region13
    $region12: #{tpu_custom_call.1} parent=1 // pred_region
      %38 = vsyncadd [#allocation6], 0
      %s40 = sshll.u32 %s2, 4
      %s41 = int_to_ptr.hbm [resolvable:$true] %s40
      %s42 = sshll.u32 [#allocation7], 4
      %s43 = int_to_ptr.vmem [resolvable:$true] %s42
      %45 = dma.hbm_to_vmem [thread:$0]  %s41, 96, %s43, [#allocation6]
    $region13: #{tpu_custom_call.1} parent=1 // pred_fallthru
      _
    // Predicated region
    $region14: #{tpu_custom_call.1} parent=1 // pred_check
      _
    $region15: #{tpu_custom_call.1} parent=1 // pred_check_branch
      %47 = sbr.rel (0) target = $region17
    $region16: #{tpu_custom_call.1} parent=1 // pred_region
      %49 = dma.done [#allocation3], 1536
    $region17: #{tpu_custom_call.1} parent=1 // pred_fallthru
      _
    // Predicated region
    $region18: #{tpu_custom_call.1} parent=1 // pred_check
      _
    $region19: #{tpu_custom_call.1} parent=1 // pred_check_branch
      %51 = sbr.rel (0) target = $region21
    $region20: #{tpu_custom_call.1} parent=1 // pred_region
      %53 = dma.done [#allocation6], 96
    $region21: #{tpu_custom_call.1} parent=1 // pred_fallthru
      _
    // Predicated region
    $region22: #{tpu_custom_call.1} parent=1 // pred_check
      _
    $region23: #{tpu_custom_call.1} parent=1 // pred_check_branch
      %55 = sbr.rel (0) target = $region25
    $region24: #{tpu_custom_call.1} parent=1 // pred_region
      %57 = dma.done [#allocation6], 96
    $region25: #{tpu_custom_call.1} parent=1 // pred_fallthru
      _
    %v58 = vld [vmem:[#allocation2] sm:$0xff]
    %v59 = vld [vmem:[#allocation2 + $0x8] sm:$0xff]
    %v60 = vld [vmem:[#allocation2 + $0x10] sm:$0xff]
    %v61 = vld [vmem:[#allocation2 + $0x18] sm:$0xff]
    %v62 = vld [vmem:[#allocation2 + $0x20] sm:$0xff]
    %v63 = vld [vmem:[#allocation2 + $0x28] sm:$0xff]
    %v64 = vld [vmem:[#allocation2 + $0x30] sm:$0xff]
    %v65 = vld [vmem:[#allocation2 + $0x38] sm:$0xff]
    %v66 = vld [vmem:[#allocation2 + $0x40] sm:$0xff]
    %v67 = vld [vmem:[#allocation2 + $0x48] sm:$0xff]
    %v68 = vld [vmem:[#allocation2 + $0x50] sm:$0xff]
    %v69 = vld [vmem:[#allocation2 + $0x58] sm:$0xff]
    %v70 = vld [vmem:[#allocation5] sm:$0x3f]
    %v72 = vperm.slane %v70, 0
    %v73 = vperm.slane %v70, 1
    %v74 = vperm.slane %v70, 2
    %v75 = vperm.slane %v70, 3
    %v76 = vperm.slane %v70, 4
    %v77 = vperm.slane %v70, 5
    %v84 = vmul.f32 %v58, %v72
    %v85 = vmul.f32 %v59, %v73
    %v86 = vmul.f32 %v60, %v74
    %v87 = vmul.f32 %v61, %v75
    %v88 = vmul.f32 %v62, %v76
    %v89 = vmul.f32 %v63, %v77
    %v90 = vmul.f32 %v64, %v72
    %v91 = vmul.f32 %v65, %v73
    %v92 = vmul.f32 %v66, %v74
    %v93 = vmul.f32 %v67, %v75
    %v94 = vmul.f32 %v68, %v76
    %v95 = vmul.f32 %v69, %v77
    %v96 = vld [vmem:[#allocation7] sm:$0x3f]
    %v98 = vperm.slane %v96, 0
    %v99 = vperm.slane %v96, 1
    %v100 = vperm.slane %v96, 2
    %v101 = vperm.slane %v96, 3
    %v102 = vperm.slane %v96, 4
    %v103 = vperm.slane %v96, 5
    %v110 = vadd.f32 %v84, %v98
    %v111 = vadd.f32 %v85, %v99
    %v112 = vadd.f32 %v86, %v100
    %v113 = vadd.f32 %v87, %v101
    %v114 = vadd.f32 %v88, %v102
    %v115 = vadd.f32 %v89, %v103
    %v116 = vadd.f32 %v90, %v98
    %v117 = vadd.f32 %v91, %v99
    %v118 = vadd.f32 %v92, %v100
    %v119 = vadd.f32 %v93, %v101
    %v120 = vadd.f32 %v94, %v102
    %v121 = vadd.f32 %v95, %v103
    %122 = vst [vmem:[#allocation8] sm:$0xff] %v110
    %123 = vst [vmem:[#allocation8 + $0x8] sm:$0xff] %v111
    %124 = vst [vmem:[#allocation8 + $0x10] sm:$0xff] %v112
    %125 = vst [vmem:[#allocation8 + $0x18] sm:$0xff] %v113
    %126 = vst [vmem:[#allocation8 + $0x20] sm:$0xff] %v114
    %127 = vst [vmem:[#allocation8 + $0x28] sm:$0xff] %v115
    %128 = vst [vmem:[#allocation8 + $0x30] sm:$0xff] %v116
    %129 = vst [vmem:[#allocation8 + $0x38] sm:$0xff] %v117
    %130 = vst [vmem:[#allocation8 + $0x40] sm:$0xff] %v118
    %131 = vst [vmem:[#allocation8 + $0x48] sm:$0xff] %v119
    %132 = vst [vmem:[#allocation8 + $0x50] sm:$0xff] %v120
    %133 = vst [vmem:[#allocation8 + $0x58] sm:$0xff] %v121
    // Predicated region
    $region26: #{tpu_custom_call.1} parent=1 // pred_check
      _
    $region27: #{tpu_custom_call.1} parent=1 // pred_check_branch
      %135 = sbr.rel (0) target = $region29
    $region28: #{tpu_custom_call.1} parent=1 // pred_region
      %137 = vsyncadd [#allocation4], 0
      %s138 = sshll.u32 [#allocation8], 4
      %s139 = int_to_ptr.vmem [resolvable:$true] %s138
      %s140 = sshll.u32 %s3, 4
      %s141 = int_to_ptr.hbm [resolvable:$true] %s140
      %146 = dma.vmem_to_hbm [thread:$0]  %s139, 1536, %s141, [#allocation4], 768, 768, 48
    $region29: #{tpu_custom_call.1} parent=1 // pred_fallthru
      _
    // Predicated region
    $region30: #{tpu_custom_call.1} parent=1 // pred_check
      _
    $region31: #{tpu_custom_call.1} parent=1 // pred_check_branch
      %148 = sbr.rel (0) target = $region33
    $region32: #{tpu_custom_call.1} parent=1 // pred_region
      %150 = dma.done [#allocation4], 1536
    $region33: #{tpu_custom_call.1} parent=1 // pred_fallthru
      _
    %151 = vsyncpa [#allocation3], 1
    %152 = vsyncpa [#allocation6], 1
    %153 = vsyncpa [#allocation4], 1

</llo_original>
